<compile_context>
chip_gen: v7x
topology: tpu7x:2x2x1
jax: 0.10.0
libtpu: 0.0.40
codegen_flags: <defaults>
</compile_context>

<pallas_src>
import math
from functools import partial

import jax
import jax.numpy as jnp
from jax import lax
from jax.experimental import pallas as pl
from jax.experimental.pallas import tpu as pltpu

_MAX_BATCHES_PER_BLOCK = 16  # bound on the unrolled per-batch loop in the cosine kernel


def _rows_to_acc(x, acc_rows):
    """Layout-preserving partial reduction (R, C) -> (acc_rows, C): split the major axis
    into groups of acc_rows and sum groups elementwise (pure VPU adds, no cross-lane)."""
    r = x.shape[0]
    if r == acc_rows:
        return x
    return x.reshape(r // acc_rows, acc_rows, x.shape[1]).sum(axis=0)


# ----------------------------------------------------------------------------------------
# linear schedule: dsigma_dt is a compile-time constant
# ----------------------------------------------------------------------------------------
def _fm_linear_kernel(
    pred_ref, tgt_ref, x0_ref, nz_ref,
    *refs,
    dsigma_dt: float,
    compute_reg: bool,
    n_rows: int,
    row_tile: int,
    acc_rows: int,
    blocks_per_core: int,
    num_row_blocks: int,
    needs_mask: bool,
):
    if compute_reg:
        sse_ref, norm_ref, acc_sse, acc_norm = refs
    else:
        sse_ref, acc_sse = refs
        norm_ref = None
        acc_norm = None

    i = pl.program_id(1)

    @pl.when(i == 0)
    def _init():
        acc_sse[...] = jnp.zeros_like(acc_sse)
        if compute_reg:
            acc_norm[...] = jnp.zeros_like(acc_norm)

    pred = pred_ref[...].astype(jnp.float32)
    tgt = tgt_ref[...].astype(jnp.float32)
    x0 = x0_ref[...].astype(jnp.float32)
    nz = nz_ref[...].astype(jnp.float32)

    diff = pred - (tgt - x0 - jnp.float32(dsigma_dt) * nz)
    sq = diff * diff                                        # (TR, D)
    tok = None
    if compute_reg:
        tok = jnp.sqrt(jnp.sum(pred * pred, axis=-1, keepdims=True))  # (TR, 1)

    def _accumulate(sq_v, tok_v):
        acc_sse[...] += _rows_to_acc(sq_v, acc_rows)
        if compute_reg:
            acc_norm[...] += _rows_to_acc(tok_v, acc_rows)

    if needs_mask:
        lb = pl.program_id(0) * blocks_per_core + i          # logical row-block index

        @pl.when(lb < num_row_blocks - 1)
        def _full_block():
            _accumulate(sq, tok)

        @pl.when(lb >= num_row_blocks - 1)
        def _edge_block():
            rows = lb * row_tile + lax.broadcasted_iota(jnp.int32, (row_tile, 1), 0)
            valid = rows < n_rows
            sq_m = jnp.where(valid, sq, 0.0)
            tok_m = jnp.where(valid, tok, 0.0) if compute_reg else None
            _accumulate(sq_m, tok_m)
    else:
        _accumulate(sq, tok)

    @pl.when(i == pl.num_programs(1) - 1)
    def _finalize():
        sse_ref[...] = jnp.full(sse_ref.shape, jnp.sum(acc_sse[...]), dtype=jnp.float32)
        if compute_reg:
            norm_ref[...] = jnp.full(norm_ref.shape, jnp.sum(acc_norm[...]), dtype=jnp.float32)


# ----------------------------------------------------------------------------------------
# cosine schedule: per-batch dsigma_dt arrives via scalar prefetch (SMEM); row blocks are
# aligned to whole batches so the kernel only needs SMEM scalar reads.
# ----------------------------------------------------------------------------------------
def _fm_cosine_kernel(
    dsig_ref,                                   # SMEM (B,) f32 (scalar prefetch)
    pred_ref, tgt_ref, x0_ref, nz_ref,
    *refs,
    compute_reg: bool,
    seq_len: int,
    num_batches: int,
    batches_per_block: int,
    acc_rows: int,
    blocks_per_core: int,
    n_rows: int,
    row_tile: int,
    needs_mask: bool,
    batch_aligned: bool,
):
    if compute_reg:
        sse_ref, norm_ref, acc_sse, acc_norm = refs
    else:
        sse_ref, acc_sse = refs
        norm_ref = None
        acc_norm = None

    i = pl.program_id(1)

    @pl.when(i == 0)
    def _init():
        acc_sse[...] = jnp.zeros_like(acc_sse)
        if compute_reg:
            acc_norm[...] = jnp.zeros_like(acc_norm)

    lb = pl.program_id(0) * blocks_per_core + i              # logical batch-block index
    b0 = lb * batches_per_block
    d_dim = pred_ref.shape[-1]

    if batch_aligned:
        # S % 8 == 0: process one whole batch at a time; every ref slice is a static,
        # sublane-aligned slice and dsigma is one SMEM scalar per batch.
        part_sse = jnp.zeros((acc_rows, d_dim), jnp.float32)
        part_norm = jnp.zeros((acc_rows, 1), jnp.float32) if compute_reg else None
        for j in range(batches_per_block):                   # static unroll, <= 16
            b_idx = b0 + j
            d_j = dsig_ref[jnp.minimum(b_idx, num_batches - 1)]
            r0 = j * seq_len
            pred = pred_ref[r0:r0 + seq_len, :].astype(jnp.float32)
            tgt = tgt_ref[r0:r0 + seq_len, :].astype(jnp.float32)
            x0 = x0_ref[r0:r0 + seq_len, :].astype(jnp.float32)
            nz = nz_ref[r0:r0 + seq_len, :].astype(jnp.float32)
            diff = pred - (tgt - x0 - d_j * nz)
            contrib = _rows_to_acc(diff * diff, acc_rows)
            contrib_n = None
            if compute_reg:
                tok = jnp.sqrt(jnp.sum(pred * pred, axis=-1, keepdims=True))
                contrib_n = _rows_to_acc(tok, acc_rows)
            if needs_mask:
                valid = b_idx < num_batches                  # whole sub-block valid or not
                contrib = jnp.where(valid, contrib, 0.0)
                if compute_reg:
                    contrib_n = jnp.where(valid, contrib_n, 0.0)
            part_sse = part_sse + contrib
            if compute_reg:
                part_norm = part_norm + contrib_n
        acc_sse[...] += part_sse
        if compute_reg:
            acc_norm[...] += part_norm
    else:
        # Odd S: build the per-row dsigma with a short select chain over the (<=16)
        # batches in this block, then do one pass over the whole block.
        rows = lax.broadcasted_iota(jnp.int32, (row_tile, 1), 0)
        dsig_rows = jnp.zeros((row_tile, 1), jnp.float32)
        for j in range(batches_per_block):                   # static unroll, <= 16
            d_j = dsig_ref[jnp.minimum(b0 + j, num_batches - 1)]
            in_j = jnp.logical_and(rows >= j * seq_len, rows < (j + 1) * seq_len)
            dsig_rows = jnp.where(in_j, d_j, dsig_rows)

        pred = pred_ref[...].astype(jnp.float32)
        tgt = tgt_ref[...].astype(jnp.float32)
        x0 = x0_ref[...].astype(jnp.float32)
        nz = nz_ref[...].astype(jnp.float32)
        diff = pred - (tgt - x0 - dsig_rows * nz)
        sq = diff * diff
        tok = None
        if compute_reg:
            tok = jnp.sqrt(jnp.sum(pred * pred, axis=-1, keepdims=True))
        if needs_mask:
            valid = (lb * row_tile + rows) < n_rows
            sq = jnp.where(valid, sq, 0.0)
            if compute_reg:
                tok = jnp.where(valid, tok, 0.0)
        acc_sse[...] += _rows_to_acc(sq, acc_rows)
        if compute_reg:
            acc_norm[...] += _rows_to_acc(tok, acc_rows)

    @pl.when(i == pl.num_programs(1) - 1)
    def _finalize():
        sse_ref[...] = jnp.full(sse_ref.shape, jnp.sum(acc_sse[...]), dtype=jnp.float32)
        if compute_reg:
            norm_ref[...] = jnp.full(norm_ref.shape, jnp.sum(acc_norm[...]), dtype=jnp.float32)


# ----------------------------------------------------------------------------------------
# wrapper
# ----------------------------------------------------------------------------------------
def _choose_row_tile(n_rows: int, d: int, itemsize: int, target_bytes: int) -> int:
    """Largest multiple-of-8 row tile with ~target_bytes per input block (capped by n_rows)."""
    cap = max(8, (target_bytes // max(1, d * itemsize)) // 8 * 8)
    if n_rows <= cap:
        if n_rows < 8 or n_rows % 8 == 0:
            return n_rows
        return (n_rows // 8) * 8      # partial tail handled by in-kernel masking
    return cap


def _device_kind() -> str:
    try:
        return jax.devices()[0].device_kind.lower()
    except Exception:
        return ""


def blip3o_flow_matching_loss(
    model_output,            # [B, S, D] f32 or bf16 (predicted velocity)
    target_samples,          # [B, S, D]             (x_1, CLIP targets)
    timesteps,               # [B]        float
    x_0,                     # [B, S, D]             (source noise; torch samples it)
    noise,                   # [B, S, D]             (additional noise)
    eva_conditioning=None,   # [B, S, eva_dim] or None
    *,
    sigma_min: float = 1e-4,
    sigma_max: float = 1.0,
    prediction_type: str = "v_prediction",
    schedule_type: str = "linear",
    clip_dim: int = 768,
    eva_dim: int = 1280,
    regularization_weight: float = 0.0,
    row_block_bytes=None,    # per-input bytes per block; None -> generation-aware default
    num_cores=None,          # None -> 2 on v7x (2 TC/chip), 1 on v5e/v6e
):
    assert prediction_type == "v_prediction", "only v_prediction implemented"
    # TODO(synk): prediction_type='epsilon' and reduction='sum'/'none' variants not implemented.
    assert 0 <= sigma_min < sigma_max <= 10.0
    if schedule_type not in ("linear", "cosine"):
        raise ValueError(f"Unknown schedule type: {schedule_type}")
    assert target_samples.shape[-1] == clip_dim, (
        f"Expected CLIP dim {clip_dim}, got {target_samples.shape[-1]}")
    if eva_conditioning is not None:
        assert eva_conditioning.shape[-1] == eva_dim, (
            f"Expected EVA dim {eva_dim}, got {eva_conditioning.shape[-1]}")

    B, S, D = target_samples.shape
    N = B * S
    compute_reg = (eva_conditioning is not None) and (regularization_weight > 0.0)

    kind = _device_kind()
    is_v7x = ("v7" in kind) or ("tpu7" in kind)
    if num_cores is None:
        num_cores = 2 if is_v7x else 1            # v5e/v6e have a single TensorCore
    if row_block_bytes is None:
        # v7x has 64 MiB VMEM per TensorCore (vs 128 MiB on v5e/v6e) -> smaller blocks.
        row_block_bytes = (3 << 20) if is_v7x else (4 << 20)

    itemsize = jnp.dtype(model_output.dtype).itemsize

    pred2 = model_output.reshape(N, D)
    tgt2 = target_samples.reshape(N, D)
    x02 = x_0.reshape(N, D)
    nz2 = noise.reshape(N, D)

    if schedule_type == "linear":
        TR = _choose_row_tile(N, D, itemsize, row_block_bytes)
        nb = 0  # unused
    else:
        # Blocks cover whole batches so dsigma stays per-batch (SMEM scalars).
        per_batch = S * D * itemsize
        want = max(1, min(_MAX_BATCHES_PER_BLOCK, row_block_bytes // max(1, per_batch)))
        step = 8 // math.gcd(S, 8)                # smallest nb with (nb*S) % 8 == 0
        if want >= B or B <= step:
            nb = B
        else:
            nb = max(step, (want // step) * step)
        nb = min(nb, B)
        TR = nb * S
        if TR * D * itemsize > (32 << 20):
            # TODO(synk): tile odd/huge sequences within a batch for the cosine schedule.
            raise NotImplementedError("cosine schedule with a single batch larger than 32 MiB")

    NRB = pl.cdiv(N, TR)                          # total row blocks
    NC = num_cores if (num_cores > 1 and NRB >= num_cores) else 1
    BPC = pl.cdiv(NRB, NC)                        # row blocks per core
    has_dup = (NC * BPC != NRB)
    if schedule_type == "linear":
        has_tail = (N % TR != 0)
    else:
        has_tail = (B % nb != 0)
    needs_mask = has_dup or has_tail
    acc_rows = 8 if TR % 8 == 0 else TR

    if schedule_type == "linear":
        if has_dup:
            data_map = lambda c, i: (jnp.minimum(c * BPC + i, NRB - 1), 0)
        else:
            data_map = lambda c, i: (c * BPC + i, 0)
        out_map = lambda c, i: (c, 0, 0)
    else:
        if has_dup:
            data_map = lambda c, i, dsig: (jnp.minimum(c * BPC + i, NRB - 1), 0)
        else:
            data_map = lambda c, i, dsig: (c * BPC + i, 0)
        out_map = lambda c, i, dsig: (c, 0, 0)

    data_spec = pl.BlockSpec((TR, D), data_map)
    out_sds = jax.ShapeDtypeStruct((NC, 8, 128), jnp.float32)

    out_shapes = [out_sds]
    out_specs = [pl.BlockSpec((1, 8, 128), out_map)]
    scratch = [pltpu.VMEM((acc_rows, D), jnp.float32)]         # vector SSE accumulator
    if compute_reg:
        out_shapes.append(out_sds)
        out_specs.append(pl.BlockSpec((1, 8, 128), out_map))
        scratch.append(pltpu.VMEM((acc_rows, 1), jnp.float32))  # per-token norm accumulator

    # VMEM budget: 4 inputs double-buffered + accumulators/outputs + headroom.
    data_bytes = 2 * 4 * TR * D * itemsize
    vmem_cap = (48 << 20) if is_v7x else (100 << 20)
    vmem_limit = int(min(vmem_cap, max(32 << 20, data_bytes + (8 << 20))))

    compiler_params = pltpu.CompilerParams(
        dimension_semantics=("parallel", "arbitrary"),
        vmem_limit_bytes=vmem_limit,
    )

    if schedule_type == "linear":
        kernel = partial(
            _fm_linear_kernel,
            dsigma_dt=-(sigma_max - sigma_min),
            compute_reg=compute_reg, n_rows=N, row_tile=TR, acc_rows=acc_rows,
            blocks_per_core=BPC, num_row_blocks=NRB, needs_mask=needs_mask,
        )
        grid_spec = pltpu.PrefetchScalarGridSpec(
            num_scalar_prefetch=0, grid=(NC, BPC),
            in_specs=[data_spec] * 4,
            out_specs=tuple(out_specs),
            scratch_shapes=scratch,
        )
        results = pl.pallas_call(
            kernel, out_shape=tuple(out_shapes), grid_spec=grid_spec,
            compiler_params=compiler_params,
        )(pred2, tgt2, x02, nz2)
    else:
        t = timesteps.astype(jnp.float32)
        dsigma_b = ((sigma_max - sigma_min) * (math.pi / 2.0)
                    * jnp.sin(math.pi * t / 2.0))              # (B,) f32
        kernel = partial(
            _fm_cosine_kernel,
            compute_reg=compute_reg, seq_len=S, num_batches=B,
            batches_per_block=nb, acc_rows=acc_rows, blocks_per_core=BPC,
            n_rows=N, row_tile=TR, needs_mask=needs_mask,
            batch_aligned=(S % 8 == 0),
        )
        grid_spec = pltpu.PrefetchScalarGridSpec(
            num_scalar_prefetch=1, grid=(NC, BPC),
            in_specs=[data_spec] * 4,
            out_specs=tuple(out_specs),
            scratch_shapes=scratch,
        )
        results = pl.pallas_call(
            kernel, out_shape=tuple(out_shapes), grid_spec=grid_spec,
            compiler_params=compiler_params,
        )(dsigma_b, pred2, tgt2, x02, nz2)

    sse_total = jnp.sum(results[0][:, 0, 0])
    flow_loss = sse_total / jnp.float32(N * D)     # F.mse_loss(..., reduction='mean')
    if compute_reg:
        norm_total = jnp.sum(results[1][:, 0, 0])
        reg_loss = jnp.float32(regularization_weight) * (norm_total / jnp.float32(N))
        return flow_loss + reg_loss
    return flow_loss
    # TODO(synk): return_metrics / compute_detailed_metrics (host-side scalar diagnostics)
    # are not implemented in the kernel path.


# ----------------------------------------------------------------------------------------
# pure-JAX reference mirroring the PyTorch forward
# ----------------------------------------------------------------------------------------
def _reference_loss(model_output, target_samples, timesteps, x_0, noise, eva_conditioning,
                    *, sigma_min, sigma_max, schedule_type, regularization_weight):
    mo = model_output.astype(jnp.float32)
    ts = target_samples.astype(jnp.float32)
    x0 = x_0.astype(jnp.float32)
    nz = noise.astype(jnp.float32)
    t = timesteps.astype(jnp.float32)
    if schedule_type == "linear":
        dsigma_dt = jnp.full_like(t, -(sigma_max - sigma_min))
    else:
        dsigma_dt = (sigma_max - sigma_min) * (math.pi / 2) * jnp.sin(math.pi * t / 2)
    dsigma_dt = dsigma_dt.reshape(-1, 1, 1)
    velocity_target = ts - x0 - dsigma_dt * nz
    flow_loss = jnp.mean((mo - velocity_target) ** 2)
    reg_loss = 0.0
    if eva_conditioning is not None and regularization_weight > 0.0:
        reg_loss = regularization_weight * jnp.mean(jnp.linalg.norm(mo, axis=-1))
    return flow_loss + reg_loss


if __name__ == "__main__":
    base = jax.random.PRNGKey(0)
    ks = jax.random.split(base, 6)

    def make_inputs(k, B, S, D, eva_dim, dtype):
        k1, k2, k3, k4, k5, k6 = jax.random.split(k, 6)
        mo = jax.random.normal(k1, (B, S, D), jnp.float32).astype(dtype)
        ts = jax.random.normal(k2, (B, S, D), jnp.float32).astype(dtype)
        tt = jax.random.uniform(k3, (B,), dtype=jnp.float32)
        x0 = jax.random.normal(k4, (B, S, D), jnp.float32).astype(dtype)
        nz = jax.random.normal(k5, (B, S, D), jnp.float32).astype(dtype)
        eva = jax.random.normal(k6, (B, S, eva_dim), jnp.float32)
        return mo, ts, tt, x0, nz, eva

    def check(out, ref, tol):
        out = jax.block_until_ready(out)
        assert jnp.allclose(out, ref, rtol=tol, atol=tol), (out, ref)

    EVA = 256

    # 1) linear + regularization, f32 (default config path; no dsigma stream at all).
    mo, ts, tt, x0, nz, eva = make_inputs(ks[0], 2, 8, 128, EVA, jnp.float32)
    out = blip3o_flow_matching_loss(mo, ts, tt, x0, nz, eva, schedule_type="linear",
                                    clip_dim=128, eva_dim=EVA, regularization_weight=0.1)
    ref = _reference_loss(mo, ts, tt, x0, nz, eva, sigma_min=1e-4, sigma_max=1.0,
                          schedule_type="linear", regularization_weight=0.1)
    check(out, ref, 1e-5)

    # 2) cosine, odd sequence length (select-chain dsigma path), no regularization.
    mo, ts, tt, x0, nz, _ = make_inputs(ks[1], 3, 10, 256, EVA, jnp.float32)
    out = blip3o_flow_matching_loss(mo, ts, tt, x0, nz, None, schedule_type="cosine",
                                    clip_dim=256, eva_dim=EVA, regularization_weight=0.0)
    ref = _reference_loss(mo, ts, tt, x0, nz, None, sigma_min=1e-4, sigma_max=1.0,
                          schedule_type="cosine", regularization_weight=0.0)
    check(out, ref, 1e-5)

    # 3) bf16 inputs (half the HBM traffic), f32 accumulation in the kernel.
    mo, ts, tt, x0, nz, eva = make_inputs(ks[2], 2, 8, 128, EVA, jnp.bfloat16)
    out = blip3o_flow_matching_loss(mo, ts, tt, x0, nz, eva, schedule_type="linear",
                                    clip_dim=128, eva_dim=EVA, regularization_weight=0.1)
    ref = _reference_loss(mo, ts, tt, x0, nz, eva, sigma_min=1e-4, sigma_max=1.0,
                          schedule_type="linear", regularization_weight=0.1)
    check(out, ref, 1e-4)

    # 4) linear, multi-block grid with a masked partial tail block (gated mask path).
    mo, ts, tt, x0, nz, eva = make_inputs(ks[3], 5, 100, 128, EVA, jnp.float32)
    out = blip3o_flow_matching_loss(mo, ts, tt, x0, nz, eva, schedule_type="linear",
                                    clip_dim=128, eva_dim=EVA, regularization_weight=0.2,
                                    row_block_bytes=64 * 1024)
    ref = _reference_loss(mo, ts, tt, x0, nz, eva, sigma_min=1e-4, sigma_max=1.0,
                          schedule_type="linear", regularization_weight=0.2)
    check(out, ref, 1e-5)

    # 5) linear, forced 2-way core split with a clamped duplicate block (odd block count).
    mo, ts, tt, x0, nz, _ = make_inputs(ks[4], 5, 40, 128, EVA, jnp.float32)
    out = blip3o_flow_matching_loss(mo, ts, tt, x0, nz, None, schedule_type="linear",
                                    clip_dim=128, eva_dim=EVA, regularization_weight=0.0,
                                    row_block_bytes=40 * 128 * 4, num_cores=2)
    ref = _reference_loss(mo, ts, tt, x0, nz, None, sigma_min=1e-4, sigma_max=1.0,
                          schedule_type="linear", regularization_weight=0.0)
    check(out, ref, 1e-5)

    # 6) cosine, batch-aligned blocks (2 batches/block), partial last group + duplicate
    #    block under a forced 2-way core split, with regularization.
    mo, ts, tt, x0, nz, eva = make_inputs(ks[5], 5, 16, 128, EVA, jnp.float32)
    out = blip3o_flow_matching_loss(mo, ts, tt, x0, nz, eva, schedule_type="cosine",
                                    clip_dim=128, eva_dim=EVA, regularization_weight=0.05,
                                    row_block_bytes=16 * 1024, num_cores=2)
    ref = _reference_loss(mo, ts, tt, x0, nz, eva, sigma_min=1e-4, sigma_max=1.0,
                          schedule_type="cosine", regularization_weight=0.05)
    check(out, ref, 1e-5)

    print("KERNEL_OK")
</pallas_src>

<mosaic_0001>
module attributes {stable_mosaic.version = 11 : i64} {
  func.func @_fm_linear_kernel(%arg0: i32, %arg1: i32, %arg2: memref<16x128xf32, #tpu.memory_space<vmem>>, %arg3: memref<16x128xf32, #tpu.memory_space<vmem>>, %arg4: memref<16x128xf32, #tpu.memory_space<vmem>>, %arg5: memref<16x128xf32, #tpu.memory_space<vmem>>, %arg6: memref<1x8x128xf32, #tpu.memory_space<vmem>>, %arg7: memref<1x8x128xf32, #tpu.memory_space<vmem>>, %arg8: memref<8x128xf32, #tpu.memory_space<vmem>>, %arg9: memref<8x1xf32, #tpu.memory_space<vmem>>) attributes {dimension_semantics = [#tpu.dimension_semantics<parallel>, #tpu.dimension_semantics<arbitrary>], iteration_bounds = array<i64: 1, 1>, scalar_prefetch = 0 : i64, scratch_operands = 2 : i64, tpu.core_type = #tpu.core_type<tc>, window_params = [{transform_indices = @transform_0, window_bounds = array<i64: 16, 128>}, {transform_indices = @transform_1, window_bounds = array<i64: 16, 128>}, {transform_indices = @transform_2, window_bounds = array<i64: 16, 128>}, {transform_indices = @transform_3, window_bounds = array<i64: 16, 128>}, {transform_indices = @transform_4, window_bounds = array<i64: 1, 8, 128>}, {transform_indices = @transform_5, window_bounds = array<i64: 1, 8, 128>}]} {
    %c0_i32 = arith.constant 0 : i32
    %0 = arith.cmpi eq, %arg1, %c0_i32 : i32
    %1 = arith.extui %0 : i1 to i32
    %c0_i32_0 = arith.constant 0 : i32
    %2 = arith.cmpi ne, %1, %c0_i32_0 : i32
    scf.if %2 {
      %cst_21 = arith.constant 0.000000e+00 : f32
      %30 = vector.broadcast %cst_21 : f32 to vector<8x128xf32>
      %c0_22 = arith.constant 0 : index
      %c0_23 = arith.constant 0 : index
      %31 = vector.load %arg8[%c0_22, %c0_23] : memref<8x128xf32, #tpu.memory_space<vmem>>, vector<8x128xf32>
      tpu.vector_store %arg8[%c0_22, %c0_23], %30 {strides = array<i32>} : memref<8x128xf32, #tpu.memory_space<vmem>>, vector<8x128xf32>,
      %cst_24 = arith.constant 0.000000e+00 : f32
      %32 = vector.broadcast %cst_24 : f32 to vector<8x1xf32>
      %c0_25 = arith.constant 0 : index
      %c0_26 = arith.constant 0 : index
      %33 = vector.load %arg9[%c0_25, %c0_26] : memref<8x1xf32, #tpu.memory_space<vmem>>, vector<8x1xf32>
      tpu.vector_store %arg9[%c0_25, %c0_26], %32 {strides = array<i32>} : memref<8x1xf32, #tpu.memory_space<vmem>>, vector<8x1xf32>,
    } else {
    }
    %c0 = arith.constant 0 : index
    %c0_1 = arith.constant 0 : index
    %3 = vector.load %arg2[%c0, %c0_1] : memref<16x128xf32, #tpu.memory_space<vmem>>, vector<16x128xf32>
    %c0_2 = arith.constant 0 : index
    %c0_3 = arith.constant 0 : index
    %4 = vector.load %arg3[%c0_2, %c0_3] : memref<16x128xf32, #tpu.memory_space<vmem>>, vector<16x128xf32>
    %c0_4 = arith.constant 0 : index
    %c0_5 = arith.constant 0 : index
    %5 = vector.load %arg4[%c0_4, %c0_5] : memref<16x128xf32, #tpu.memory_space<vmem>>, vector<16x128xf32>
    %c0_6 = arith.constant 0 : index
    %c0_7 = arith.constant 0 : index
    %6 = vector.load %arg5[%c0_6, %c0_7] : memref<16x128xf32, #tpu.memory_space<vmem>>, vector<16x128xf32>
    %7 = arith.subf %4, %5 : vector<16x128xf32>
    %cst = arith.constant -0.999899983 : f32
    %8 = vector.broadcast %cst : f32 to vector<16x128xf32>
    %9 = arith.mulf %8, %6 : vector<16x128xf32>
    %10 = arith.subf %7, %9 : vector<16x128xf32>
    %11 = arith.subf %3, %10 : vector<16x128xf32>
    %12 = arith.mulf %11, %11 : vector<16x128xf32>
    %13 = arith.mulf %3, %3 : vector<16x128xf32>
    %cst_8 = arith.constant dense<0.000000e+00> : vector<16xf32>
    %14 = vector.multi_reduction <add>, %13, %cst_8 [1] : vector<16x128xf32> to vector<16xf32>
    %15 = vector.shape_cast %14 : vector<16xf32> to vector<16x1xf32>
    %16 = math.sqrt %15 : vector<16x1xf32>
    %c0_9 = arith.constant 0 : index
    %c0_10 = arith.constant 0 : index
    %17 = vector.load %arg8[%c0_9, %c0_10] : memref<8x128xf32, #tpu.memory_space<vmem>>, vector<8x128xf32>
    %18 = vector.shape_cast %12 : vector<16x128xf32> to vector<2x8x128xf32>
    %cst_11 = arith.constant dense<0.000000e+00> : vector<8x128xf32>
    %19 = vector.multi_reduction <add>, %18, %cst_11 [0] : vector<2x8x128xf32> to vector<8x128xf32>
    %20 = arith.addf %17, %19 : vector<8x128xf32>
    %c0_12 = arith.constant 0 : index
    %c0_13 = arith.constant 0 : index
    %21 = vector.load %arg8[%c0_12, %c0_13] : memref<8x128xf32, #tpu.memory_space<vmem>>, vector<8x128xf32>
    tpu.vector_store %arg8[%c0_12, %c0_13], %20 {strides = array<i32>} : memref<8x128xf32, #tpu.memory_space<vmem>>, vector<8x128xf32>,
    %c0_14 = arith.constant 0 : index
    %c0_15 = arith.constant 0 : index
    %22 = vector.load %arg9[%c0_14, %c0_15] : memref<8x1xf32, #tpu.memory_space<vmem>>, vector<8x1xf32>
    %23 = vector.shape_cast %16 : vector<16x1xf32> to vector<2x8x1xf32>
    %cst_16 = arith.constant dense<0.000000e+00> : vector<8x1xf32>
    %24 = vector.multi_reduction <add>, %23, %cst_16 [0] : vector<2x8x1xf32> to vector<8x1xf32>
    %25 = arith.addf %22, %24 : vector<8x1xf32>
    %c0_17 = arith.constant 0 : index
    %c0_18 = arith.constant 0 : index
    %26 = vector.load %arg9[%c0_17, %c0_18] : memref<8x1xf32, #tpu.memory_space<vmem>>, vector<8x1xf32>
    tpu.vector_store %arg9[%c0_17, %c0_18], %25 {strides = array<i32>} : memref<8x1xf32, #tpu.memory_space<vmem>>, vector<8x1xf32>,
    %c0_i32_19 = arith.constant 0 : i32
    %27 = arith.cmpi eq, %arg1, %c0_i32_19 : i32
    %28 = arith.extui %27 : i1 to i32
    %c0_i32_20 = arith.constant 0 : i32
    %29 = arith.cmpi ne, %28, %c0_i32_20 : i32
    scf.if %29 {
      %c0_21 = arith.constant 0 : index
      %c0_22 = arith.constant 0 : index
      %30 = vector.load %arg8[%c0_21, %c0_22] : memref<8x128xf32, #tpu.memory_space<vmem>>, vector<8x128xf32>
      %31 = vector.shape_cast %30 : vector<8x128xf32> to vector<1x8x128xf32>
      %cst_23 = arith.constant dense<0.000000e+00> : vector<1xf32>
      %32 = vector.multi_reduction <add>, %31, %cst_23 [1, 2] : vector<1x8x128xf32> to vector<1xf32>
      %33 = vector.shape_cast %32 : vector<1xf32> to vector<1x1x1xf32>
      %34 = vector.extract %33[0, 0, 0] : f32 from vector<1x1x1xf32>
      %35 = vector.broadcast %34 : f32 to vector<1x8x128xf32>
      %c0_24 = arith.constant 0 : index
      %c0_25 = arith.constant 0 : index
      %c0_26 = arith.constant 0 : index
      %36 = vector.load %arg6[%c0_24, %c0_25, %c0_26] : memref<1x8x128xf32, #tpu.memory_space<vmem>>, vector<1x8x128xf32>
      tpu.vector_store %arg6[%c0_24, %c0_25, %c0_26], %35 {strides = array<i32>} : memref<1x8x128xf32, #tpu.memory_space<vmem>>, vector<1x8x128xf32>,
      %c0_27 = arith.constant 0 : index
      %c0_28 = arith.constant 0 : index
      %37 = vector.load %arg9[%c0_27, %c0_28] : memref<8x1xf32, #tpu.memory_space<vmem>>, vector<8x1xf32>
      %38 = vector.shape_cast %37 : vector<8x1xf32> to vector<1x8x1xf32>
      %cst_29 = arith.constant dense<0.000000e+00> : vector<1xf32>
      %39 = vector.multi_reduction <add>, %38, %cst_29 [1, 2] : vector<1x8x1xf32> to vector<1xf32>
      %40 = vector.shape_cast %39 : vector<1xf32> to vector<1x1x1xf32>
      %41 = vector.extract %40[0, 0, 0] : f32 from vector<1x1x1xf32>
      %42 = vector.broadcast %41 : f32 to vector<1x8x128xf32>
      %c0_30 = arith.constant 0 : index
      %c0_31 = arith.constant 0 : index
      %c0_32 = arith.constant 0 : index
      %43 = vector.load %arg7[%c0_30, %c0_31, %c0_32] : memref<1x8x128xf32, #tpu.memory_space<vmem>>, vector<1x8x128xf32>
      tpu.vector_store %arg7[%c0_30, %c0_31, %c0_32], %42 {strides = array<i32>} : memref<1x8x128xf32, #tpu.memory_space<vmem>>, vector<1x8x128xf32>,
    } else {
    }
    return
  }
  func.func @transform_0(%arg0: i32, %arg1: i32) -> (i32, i32) {
    %c1_i32 = arith.constant 1 : i32
    %0 = arith.muli %arg0, %c1_i32 : i32
    %1 = arith.addi %0, %arg1 : i32
    %c0_i32 = arith.constant 0 : i32
    %c0_i32_0 = arith.constant 0 : i32
    return %1, %c0_i32 : i32, i32
  }
  func.func @transform_1(%arg0: i32, %arg1: i32) -> (i32, i32) {
    %c1_i32 = arith.constant 1 : i32
    %0 = arith.muli %arg0, %c1_i32 : i32
    %1 = arith.addi %0, %arg1 : i32
    %c0_i32 = arith.constant 0 : i32
    %c0_i32_0 = arith.constant 0 : i32
    return %1, %c0_i32 : i32, i32
  }
  func.func @transform_2(%arg0: i32, %arg1: i32) -> (i32, i32) {
    %c1_i32 = arith.constant 1 : i32
    %0 = arith.muli %arg0, %c1_i32 : i32
    %1 = arith.addi %0, %arg1 : i32
    %c0_i32 = arith.constant 0 : i32
    %c0_i32_0 = arith.constant 0 : i32
    return %1, %c0_i32 : i32, i32
  }
  func.func @transform_3(%arg0: i32, %arg1: i32) -> (i32, i32) {
    %c1_i32 = arith.constant 1 : i32
    %0 = arith.muli %arg0, %c1_i32 : i32
    %1 = arith.addi %0, %arg1 : i32
    %c0_i32 = arith.constant 0 : i32
    %c0_i32_0 = arith.constant 0 : i32
    return %1, %c0_i32 : i32, i32
  }
  func.func @transform_4(%arg0: i32, %arg1: i32) -> (i32, i32, i32) {
    %c0_i32 = arith.constant 0 : i32
    %c0_i32_0 = arith.constant 0 : i32
    %c0_i32_1 = arith.constant 0 : i32
    return %arg0, %c0_i32, %c0_i32_0 : i32, i32, i32
  }
  func.func @transform_5(%arg0: i32, %arg1: i32) -> (i32, i32, i32) {
    %c0_i32 = arith.constant 0 : i32
    %c0_i32_0 = arith.constant 0 : i32
    %c0_i32_1 = arith.constant 0 : i32
    return %arg0, %c0_i32, %c0_i32_0 : i32, i32, i32
  }
}

</mosaic_0001>

<llo_original>
// kernel: tpu_custom_call.1
$region0: #{tpu_custom_call.1}
  #allocation0 [shape = 'u32[]', space=smem, size = 0x4, offset = 0x4, fixed_abs, tag = 'smem constant byte address 0x4 - core index']
  #allocation1 [shape = 'u32[144,128]{1,0:T(1,128)}', space=vmem, size = 0x12000, scoped, tag = 'internal scratch']
  #allocation2 [shape = 'f32[8,128]{1,0:T(8,128)}', space=vmem, size = 0x1000, scoped, tag = 'scratch operand']
  #allocation3 [shape = 'f32[8,1]{1,0:T(8,128)}', space=vmem, size = 0x1000, scoped, tag = 'scratch operand']
  %s0 = inlined_call_operand.hbm [shape: f32[16,128], index: 0, kind: input, shape index: {}]
  %s1 = inlined_call_operand.hbm [shape: f32[16,128], index: 1, kind: input, shape index: {}]
  %s2 = inlined_call_operand.hbm [shape: f32[16,128], index: 2, kind: input, shape index: {}]
  %s3 = inlined_call_operand.hbm [shape: f32[16,128], index: 3, kind: input, shape index: {}]
  %s4 = inlined_call_operand.hbm [shape: f32[1,8,128], index: 4, kind: output, shape index: {0}]
  %s5 = inlined_call_operand.hbm [shape: f32[1,8,128], index: 5, kind: output, shape index: {1}]
  %6 = xla_tuple %s4, %s5
  %s7 = sld [smem:[#allocation0]]
  $region58: #{tpu_custom_call.1} parent=0
    _
  %s9 = ssub.s32 1, %s7
  %s10 = scalar_select 0, %s9, %s7
  $region1: #{tpu_custom_call.1} parent=0
    #allocation4 [shape = 'u8[8192]{0}', space=vmem, size = 0x2000, scoped, tag = 'input window, operand 0, single buffered']
    #allocation5 [shape = 's32[1]{0}', space=sflag, size = 0x4, scoped, tag = 'scoped memory for tpu_custom_call.1']
    #allocation6 [shape = 's32[1]{0}', space=sflag, size = 0x4, scoped, tag = 'scoped memory for tpu_custom_call.1']
    #allocation7 [shape = 'u8[8192]{0}', space=vmem, size = 0x2000, scoped, tag = 'input window, operand 1, single buffered']
    #allocation8 [shape = 's32[1]{0}', space=sflag, size = 0x4, scoped, tag = 'scoped memory for tpu_custom_call.1']
    #allocation9 [shape = 'u8[8192]{0}', space=vmem, size = 0x2000, scoped, tag = 'input window, operand 2, single buffered']
    #allocation10 [shape = 'u8[8192]{0}', space=vmem, size = 0x2000, scoped, tag = 'input window, operand 3, single buffered']
    #allocation11 [shape = 's32[1]{0}', space=sflag, size = 0x4, scoped, tag = 'scoped memory for tpu_custom_call.1']
    #allocation12 [shape = 'u8[4096]{0}', space=vmem, size = 0x1000, scoped, tag = 'output window, operand 0, single buffered']
    #allocation13 [shape = 'u8[4096]{0}', space=vmem, size = 0x1000, scoped, tag = 'output window, operand 1, single buffered']
    #allocation14 [shape = 's32[1]{0}', space=sflag, size = 0x4, scoped, tag = 'scoped memory for tpu_custom_call.1']
    %11 = vsyncpa [#allocation5], 0
    %12 = vsyncpa [#allocation8], 0
    %13 = vsyncpa [#allocation11], 0
    %14 = vsyncpa [#allocation6], 0
    %15 = vsyncpa [#allocation14], 0
    // Predicated region
    $region2: #{tpu_custom_call.1} parent=1 // pred_check
      _
    $region3: #{tpu_custom_call.1} parent=1 // pred_check_branch
      %17 = sbr.rel (0) target = $region5
    $region4: #{tpu_custom_call.1} parent=1 // pred_region
      %s18 = sadd.s32 0, 0
      %s19 = smul.u32 2, %s18
      %s21 = ssub.s32 256, 256
      %22 = vsyncadd [#allocation5], %s21
      %s23 = smul.addr %s19, 128
      %s24 = scalar_lea.hbm %s0, %s23
      %s25 = sshll.u32 [#allocation4], 4
      %s26 = int_to_ptr.vmem [resolvable:$true] %s25
      %31 = dma.hbm_to_vmem [thread:$0]  %s24, 256, %s26, [#allocation5], 128, 128, 8
    $region5: #{tpu_custom_call.1} parent=1 // pred_fallthru
      _
    // Predicated region
    $region6: #{tpu_custom_call.1} parent=1 // pred_check
      _
    $region7: #{tpu_custom_call.1} parent=1 // pred_check_branch
      %33 = sbr.rel (0) target = $region9
    $region8: #{tpu_custom_call.1} parent=1 // pred_region
      %s34 = sadd.s32 0, 0
      %s35 = smul.u32 2, %s34
      %s37 = ssub.s32 256, 256
      %38 = vsyncadd [#allocation8], %s37
      %s39 = smul.addr %s35, 128
      %s40 = scalar_lea.hbm %s1, %s39
      %s41 = sshll.u32 [#allocation7], 4
      %s42 = int_to_ptr.vmem [resolvable:$true] %s41
      %47 = dma.hbm_to_vmem [thread:$0]  %s40, 256, %s42, [#allocation8], 128, 128, 8
    $region9: #{tpu_custom_call.1} parent=1 // pred_fallthru
      _
    // Predicated region
    $region10: #{tpu_custom_call.1} parent=1 // pred_check
      _
    $region11: #{tpu_custom_call.1} parent=1 // pred_check_branch
      %49 = sbr.rel (0) target = $region13
    $region12: #{tpu_custom_call.1} parent=1 // pred_region
      %s50 = sadd.s32 0, 0
      %s51 = smul.u32 2, %s50
      %s53 = ssub.s32 256, 256
      %54 = vsyncadd [#allocation8], %s53
      %s55 = smul.addr %s51, 128
      %s56 = scalar_lea.hbm %s2, %s55
      %s57 = sshll.u32 [#allocation9], 4
      %s58 = int_to_ptr.vmem [resolvable:$true] %s57
      %63 = dma.hbm_to_vmem [thread:$0]  %s56, 256, %s58, [#allocation8], 128, 128, 8
    $region13: #{tpu_custom_call.1} parent=1 // pred_fallthru
      _
    // Predicated region
    $region14: #{tpu_custom_call.1} parent=1 // pred_check
      _
    $region15: #{tpu_custom_call.1} parent=1 // pred_check_branch
      %65 = sbr.rel (0) target = $region17
    $region16: #{tpu_custom_call.1} parent=1 // pred_region
      %s66 = sadd.s32 0, 0
      %s67 = smul.u32 2, %s66
      %s69 = ssub.s32 256, 256
      %70 = vsyncadd [#allocation11], %s69
      %s71 = smul.addr %s67, 128
      %s72 = scalar_lea.hbm %s3, %s71
      %s73 = sshll.u32 [#allocation10], 4
      %s74 = int_to_ptr.vmem [resolvable:$true] %s73
      %79 = dma.hbm_to_vmem [thread:$0]  %s72, 256, %s74, [#allocation11], 128, 128, 8
    $region17: #{tpu_custom_call.1} parent=1 // pred_fallthru
      _
    // Predicated region
    $region18: #{tpu_custom_call.1} parent=1 // pred_check
      _
    $region19: #{tpu_custom_call.1} parent=1 // pred_check_branch
      %81 = sbr.rel (0) target = $region21
    $region20: #{tpu_custom_call.1} parent=1 // pred_region
      %82 = dma.done [#allocation5], 256
    $region21: #{tpu_custom_call.1} parent=1 // pred_fallthru
      _
    // Predicated region
    $region22: #{tpu_custom_call.1} parent=1 // pred_check
      _
    $region23: #{tpu_custom_call.1} parent=1 // pred_check_branch
      %84 = sbr.rel (0) target = $region25
    $region24: #{tpu_custom_call.1} parent=1 // pred_region
      %85 = dma.done [#allocation8], 256
    $region25: #{tpu_custom_call.1} parent=1 // pred_fallthru
      _
    // Predicated region
    $region26: #{tpu_custom_call.1} parent=1 // pred_check
      _
    $region27: #{tpu_custom_call.1} parent=1 // pred_check_branch
      %87 = sbr.rel (0) target = $region29
    $region28: #{tpu_custom_call.1} parent=1 // pred_region
      %88 = dma.done [#allocation8], 256
    $region29: #{tpu_custom_call.1} parent=1 // pred_fallthru
      _
    // Predicated region
    $region30: #{tpu_custom_call.1} parent=1 // pred_check
      _
    $region31: #{tpu_custom_call.1} parent=1 // pred_check_branch
      %90 = sbr.rel (0) target = $region33
    $region32: #{tpu_custom_call.1} parent=1 // pred_region
      %91 = dma.done [#allocation11], 256
    $region33: #{tpu_custom_call.1} parent=1 // pred_fallthru
      _
    %s92 = sadd.s32 0, 0
    %s93 = smul.u32 2, %s92
    %s94 = sadd.s32 0, 0
    %s95 = smul.u32 2, %s94
    %s96 = sadd.s32 0, 0
    %s97 = smul.u32 2, %s96
    %s98 = sadd.s32 0, 0
    %s99 = smul.u32 2, %s98
    %p100 = scmp.eq.s32.totalorder 0, 0
    // Predicated region
    $region34: #{tpu_custom_call.1} parent=1 // pred_check
      %p101 = pneg %p100
    $region35: #{tpu_custom_call.1} parent=1 // pred_check_branch
      %103 = sbr.rel (%p101) target = $region37
    $region36: #{tpu_custom_call.1} parent=1 // pred_region
      %104 = vst [vmem:[#allocation2] sm:$0xff] 0.0
      %vm105 = vcmask 7168
      %106 = vst.msk [vmem:[#allocation3] sm:$0xff] %vm105, 0.0
    $region37: #{tpu_custom_call.1} parent=1 // pred_fallthru
      _
    %v107 = vld [vmem:[#allocation4] sm:$0xff]
    %v108 = vld [vmem:[#allocation4 + $0x8] sm:$0xff]
    %v109 = vld [vmem:[#allocation7] sm:$0xff]
    %v110 = vld [vmem:[#allocation7 + $0x8] sm:$0xff]
    %v111 = vld [vmem:[#allocation9] sm:$0xff]
    %v112 = vld [vmem:[#allocation9 + $0x8] sm:$0xff]
    %v113 = vld [vmem:[#allocation10] sm:$0xff]
    %v114 = vld [vmem:[#allocation10 + $0x8] sm:$0xff]
    %v115 = vsub.f32 %v109, %v111
    %v116 = vsub.f32 %v110, %v112
    %v117 = vmul.f32 %v113, -0.9999
    %v118 = vmul.f32 %v114, -0.9999
    %v119 = vsub.f32 %v115, %v117
    %v120 = vsub.f32 %v116, %v118
    %v121 = vsub.f32 %v107, %v119
    %v122 = vsub.f32 %v108, %v120
    %v123 = vmul.f32 %v121, %v121
    %v124 = vmul.f32 %v122, %v122
    %v125 = vmul.f32 %v107, %v107
    %v126 = vmul.f32 %v108, %v108
    %127 = vadd.xlane.f32.xlu0 %v125
    %v128 = vpop.xlane.xlu0 %127
    %129 = vadd.xlane.f32.xlu0 %v126
    %v130 = vpop.xlane.xlu0 %129
    %v131 = vrsqrt.pop %v128
    %v132 = vmul.f32 %v128, %v131
    %vm133 = vcmp.eq.f32.partialorder %v128, inf
    %v134 = vsel %vm133, %v128, %v132
    %vm135 = vcmp.eq.f32.partialorder %v128, 0.0
    %v136 = vand.u32 %v128, 2147483648
    %v137 = vsel %vm135, %v136, %v134
    %v138 = vrsqrt.pop %v130
    %v139 = vmul.f32 %v130, %v138
    %vm140 = vcmp.eq.f32.partialorder %v130, inf
    %v141 = vsel %vm140, %v130, %v139
    %vm142 = vcmp.eq.f32.partialorder %v130, 0.0
    %v143 = vand.u32 %v130, 2147483648
    %v144 = vsel %vm142, %v143, %v141
    %v145 = vld [vmem:[#allocation2] sm:$0xff]
    %v146 = vadd.f32 %v123, %v124
    %v147 = vadd.f32 %v145, %v146
    %148 = vst [vmem:[#allocation2] sm:$0xff] %v147
    %v149 = vld [vmem:[#allocation3] sm:$0xff]
    %v150 = vadd.f32 %v137, %v144
    %v151 = vadd.f32 %v149, %v150
    %vm152 = vcmask 7168
    %153 = vst.msk [vmem:[#allocation3] sm:$0xff] %vm152, %v151
    // Predicated region
    $region38: #{tpu_custom_call.1} parent=1 // pred_check
      %p154 = pneg %p100
    $region39: #{tpu_custom_call.1} parent=1 // pred_check_branch
      %156 = sbr.rel (%p154) target = $region41
    $region40: #{tpu_custom_call.1} parent=1 // pred_region
      %v157 = vld [vmem:[#allocation2] sm:$0xff]
      %158 = vadd.xlane.f32.xlu0 %v157
      %v159 = vpop.xlane.xlu0 %158
      %v160 = vrot.slane %v159, 4
      %v161 = vadd.f32 %v159, %v160
      %v162 = vrot.slane %v161, 2
      %v163 = vadd.f32 %v161, %v162
      %v164 = vrot.slane %v163, 1
      %v165 = vadd.f32 %v163, %v164
      %s166 = vtos %v165
      %v167 = vstv %s166
      %168 = vst [vmem:[#allocation12] sm:$0xff] %v167
      %v169 = vld [vmem:[#allocation3] sm:$0xff]
      %v170 = vsel %vm152, %v169, 0.0
      %171 = vadd.xlane.f32.xlu0 %v170
      %v172 = vpop.xlane.xlu0 %171
      %v173 = vrot.slane %v172, 4
      %v174 = vadd.f32 %v172, %v173
      %v175 = vrot.slane %v174, 2
      %v176 = vadd.f32 %v174, %v175
      %v177 = vrot.slane %v176, 1
      %v178 = vadd.f32 %v176, %v177
      %s179 = vtos %v178
      %v180 = vstv %s179
      %181 = vst [vmem:[#allocation13] sm:$0xff] %v180
    $region41: #{tpu_custom_call.1} parent=1 // pred_fallthru
      _
    // Predicated region
    $region42: #{tpu_custom_call.1} parent=1 // pred_check
      _
    $region43: #{tpu_custom_call.1} parent=1 // pred_check_branch
      %183 = sbr.rel (0) target = $region45
    $region44: #{tpu_custom_call.1} parent=1 // pred_region
      %s185 = ssub.s32 128, 128
      %186 = vsyncadd [#allocation6], %s185
      %s188 = sshll.u32 [#allocation12], 4
      %s189 = int_to_ptr.vmem [resolvable:$true] %s188
      %191 = dma.vmem_to_hbm [thread:$0]  %s189, 128, %s4, [#allocation6]
    $region45: #{tpu_custom_call.1} parent=1 // pred_fallthru
      _
    // Predicated region
    $region46: #{tpu_custom_call.1} parent=1 // pred_check
      _
    $region47: #{tpu_custom_call.1} parent=1 // pred_check_branch
      %193 = sbr.rel (0) target = $region49
    $region48: #{tpu_custom_call.1} parent=1 // pred_region
      %s195 = ssub.s32 128, 128
      %196 = vsyncadd [#allocation14], %s195
      %s198 = sshll.u32 [#allocation13], 4
      %s199 = int_to_ptr.vmem [resolvable:$true] %s198
      %201 = dma.vmem_to_hbm [thread:$0]  %s199, 128, %s5, [#allocation14]
    $region49: #{tpu_custom_call.1} parent=1 // pred_fallthru
      _
    // Predicated region
    $region50: #{tpu_custom_call.1} parent=1 // pred_check
      _
    $region51: #{tpu_custom_call.1} parent=1 // pred_check_branch
      %203 = sbr.rel (0) target = $region53
    $region52: #{tpu_custom_call.1} parent=1 // pred_region
      %204 = dma.done [#allocation6], 128
    $region53: #{tpu_custom_call.1} parent=1 // pred_fallthru
      _
    // Predicated region
    $region54: #{tpu_custom_call.1} parent=1 // pred_check
      _
    $region55: #{tpu_custom_call.1} parent=1 // pred_check_branch
      %206 = sbr.rel (0) target = $region57
    $region56: #{tpu_custom_call.1} parent=1 // pred_region
      %207 = dma.done [#allocation14], 128
    $region57: #{tpu_custom_call.1} parent=1 // pred_fallthru
      _
    %208 = vsyncpa [#allocation5], 1
    %209 = vsyncpa [#allocation8], 1
    %210 = vsyncpa [#allocation11], 1
    %211 = vsyncpa [#allocation6], 1
    %212 = vsyncpa [#allocation14], 1

</llo_original>
